<compile_context>
chip_gen: v6e
topology: v6e:2x2x1
jax: 0.10.0
libtpu: 0.0.40
codegen_flags: <defaults>
</compile_context>

<pallas_src>
import functools

import jax
import jax.numpy as jnp
from jax.experimental import pallas as pl
from jax.experimental.pallas import tpu as pltpu


_BATCH_TILE = 128  # rows per grid step when batch-tiling (multiple of 8)


# ----------------------------------------------------------------------------
# Fused Pallas kernel: whole AE forward (encoder + decoder) in one body
# ----------------------------------------------------------------------------
def _ae_fused_kernel(*refs, activations):
    """refs = (x_ref, w1_ref, b1_ref, ..., wn_ref, bn_ref, o_ref)."""
    x_ref = refs[0]
    o_ref = refs[-1]
    wb = refs[1:-1]

    h = x_ref[...]
    for i, act in enumerate(activations):
        w = wb[2 * i][...]
        b = wb[2 * i + 1][...]          # (1, Dout) broadcasts over batch rows
        h = jnp.dot(h, w, preferred_element_type=jnp.float32) + b
        if act == "relu":
            h = jnp.maximum(h, 0.0)
        elif act == "sigmoid":
            # exp and approx reciprocal both run on the EUP (own VLIW slot).
            h = pl.reciprocal(1.0 + jnp.exp(-h), approx=True)
        elif act == "none":
            pass
        else:
            raise ValueError(f"unknown activation: {act}")
    o_ref[...] = h.astype(o_ref.dtype)


def _fused_ae_call(x, flat_params, activations, out_width):
    """One pallas_call for the entire forward pass."""
    batch, in_width = x.shape
    kernel = functools.partial(_ae_fused_kernel, activations=activations)
    out_shape = jax.ShapeDtypeStruct((batch, out_width), x.dtype)

    if batch > _BATCH_TILE and batch % _BATCH_TILE == 0:
        # Batch-tiled path: "parallel" grid axis lets multi-TC chips split the
        # batch; weight/bias index_maps ignore the batch axis so they are
        # fetched once and stay resident in VMEM across grid steps.
        grid = (batch // _BATCH_TILE,)
        in_specs = [pl.BlockSpec((_BATCH_TILE, in_width), lambda i: (i, 0))]
        in_specs += [pl.BlockSpec(p.shape, lambda i: (0, 0)) for p in flat_params]
        out_specs = pl.BlockSpec((_BATCH_TILE, out_width), lambda i: (i, 0))
        return pl.pallas_call(
            kernel,
            out_shape=out_shape,
            grid=grid,
            in_specs=in_specs,
            out_specs=out_specs,
            compiler_params=pltpu.CompilerParams(
                dimension_semantics=("parallel",)),
        )(x, *flat_params)

    # Small batch: single grid-less invocation, everything resident in VMEM.
    n_in = 1 + len(flat_params)
    vmem = pltpu.MemorySpace.VMEM
    return pl.pallas_call(
        kernel,
        out_shape=out_shape,
        in_specs=[pl.BlockSpec(memory_space=vmem)] * n_in,
        out_specs=pl.BlockSpec(memory_space=vmem),
    )(x, *flat_params)


# ----------------------------------------------------------------------------
# Parameter construction (deterministic, mimics torch.nn.Linear default init)
# ----------------------------------------------------------------------------
def _init_linear(key, fan_in, fan_out):
    kw, kb = jax.random.split(key)
    bound = 1.0 / float(fan_in) ** 0.5
    w = jax.random.uniform(kw, (fan_in, fan_out), jnp.float32, -bound, bound)
    b = jax.random.uniform(kb, (1, fan_out), jnp.float32, -bound, bound)
    return w, b


def build_ae_layers(key, config_encoder, config_decoder):
    """[(w, b, act), ...] for encoder followed by decoder layers."""
    cfg = list(config_encoder) + list(config_decoder)
    keys = jax.random.split(key, len(cfg))
    layers = []
    for k, (fi, fo, act) in zip(keys, cfg):
        w, b = _init_linear(k, fi, fo)
        layers.append((w, b, act))
    return layers


def prepare_kernel_params(layers):
    """Flatten (w, b) arrays for the kernel; zero-pad the LAST layer's output
    dimension up to a multiple of 128 so the final store is lane-dense."""
    activations = tuple(act for (_, _, act) in layers)
    out_dim = layers[-1][0].shape[1]
    out_padded = max(128, -(-out_dim // 128) * 128)
    flat = []
    for idx, (w, b, _) in enumerate(layers):
        if idx == len(layers) - 1 and out_padded != out_dim:
            w = jnp.pad(w, ((0, 0), (0, out_padded - out_dim)))
            b = jnp.pad(b, ((0, 0), (0, out_padded - out_dim)))
        flat += [w, b]
    return flat, activations, out_dim, out_padded


def make_ae_forward(activations, out_dim, out_padded):
    """jit-wrapped forward; activations / widths are static (closed over)."""
    @jax.jit
    def forward(flat_params, x):
        y = _fused_ae_call(x, flat_params, activations, out_padded)
        return y[:, :out_dim]          # drop lane padding
    return forward


# ----------------------------------------------------------------------------
# Pure-JAX reference (unpadded params) for correctness checking
# ----------------------------------------------------------------------------
def ae_reference(layers, x):
    h = x
    for (w, b, act) in layers:
        h = h @ w + b
        if act == "relu":
            h = jnp.maximum(h, 0.0)
        elif act == "sigmoid":
            h = jax.nn.sigmoid(h)
    return h


if __name__ == "__main__":
    # Config tuples: (in_features, out_features, activation)
    config_encoder = [(64, 32, "relu"), (32, 16, "relu")]
    config_decoder = [(16, 32, "relu"), (32, 64, "sigmoid")]

    key = jax.random.PRNGKey(0)
    pkey, xkey, xkey2 = jax.random.split(key, 3)

    layers = build_ae_layers(pkey, config_encoder, config_decoder)
    flat_params, activations, out_dim, out_padded = prepare_kernel_params(layers)
    ae_forward = make_ae_forward(activations, out_dim, out_padded)

    # Small batch -> grid-less fused kernel.
    x = jax.random.normal(xkey, (8, 64), jnp.float32)
    out = jax.block_until_ready(ae_forward(flat_params, x))
    ref = ae_reference(layers, x)
    assert out.shape == (8, 64), out.shape
    # approx reciprocal (EUP) has ~2^-12 relative error -> loose-ish tolerance.
    assert jnp.allclose(out, ref, atol=2e-3, rtol=2e-3), "small-batch mismatch"

    # Larger batch -> exercises the batch-tiled "parallel" grid path.
    x2 = jax.random.normal(xkey2, (256, 64), jnp.float32)
    out2 = jax.block_until_ready(ae_forward(flat_params, x2))
    ref2 = ae_reference(layers, x2)
    assert out2.shape == (256, 64), out2.shape
    assert jnp.allclose(out2, ref2, atol=2e-3, rtol=2e-3), "tiled-batch mismatch"

    print("KERNEL_OK")
</pallas_src>

<mosaic_0001>
module attributes {stable_mosaic.version = 11 : i64} {
  func.func @_ae_fused_kernel(%arg0: memref<8x64xf32, #tpu.memory_space<vmem>>, %arg1: memref<64x32xf32, #tpu.memory_space<vmem>>, %arg2: memref<1x32xf32, #tpu.memory_space<vmem>>, %arg3: memref<32x16xf32, #tpu.memory_space<vmem>>, %arg4: memref<1x16xf32, #tpu.memory_space<vmem>>, %arg5: memref<16x32xf32, #tpu.memory_space<vmem>>, %arg6: memref<1x32xf32, #tpu.memory_space<vmem>>, %arg7: memref<32x128xf32, #tpu.memory_space<vmem>>, %arg8: memref<1x128xf32, #tpu.memory_space<vmem>>, %arg9: memref<8x128xf32, #tpu.memory_space<vmem>>) attributes {dimension_semantics = [], scalar_prefetch = 0 : i64, scratch_operands = 0 : i64, tpu.core_type = #tpu.core_type<tc>} {
    %c0 = arith.constant 0 : index
    %c0_0 = arith.constant 0 : index
    %0 = vector.load %arg0[%c0, %c0_0] : memref<8x64xf32, #tpu.memory_space<vmem>>, vector<8x64xf32>
    %c0_1 = arith.constant 0 : index
    %c0_2 = arith.constant 0 : index
    %1 = vector.load %arg1[%c0_1, %c0_2] : memref<64x32xf32, #tpu.memory_space<vmem>>, vector<64x32xf32>
    %c0_3 = arith.constant 0 : index
    %c0_4 = arith.constant 0 : index
    %2 = vector.load %arg2[%c0_3, %c0_4] : memref<1x32xf32, #tpu.memory_space<vmem>>, vector<1x32xf32>
    %cst = arith.constant dense<0.000000e+00> : vector<8x32xf32>
    %3 = tpu.matmul %0, %1, %cst {dimension_numbers = #tpu.dot_dimension_numbers<[1], [0], [0], [1], [0, 0, 1, 1], [], []>} : vector<8x64xf32>, vector<64x32xf32>, vector<8x32xf32> -> vector<8x32xf32>
    %4 = vector.broadcast %2 : vector<1x32xf32> to vector<8x32xf32>
    %5 = arith.addf %3, %4 : vector<8x32xf32>
    %cst_5 = arith.constant 0.000000e+00 : f32
    %6 = vector.broadcast %cst_5 : f32 to vector<8x32xf32>
    %7 = arith.maximumf %5, %6 : vector<8x32xf32>
    %c0_6 = arith.constant 0 : index
    %c0_7 = arith.constant 0 : index
    %8 = vector.load %arg3[%c0_6, %c0_7] : memref<32x16xf32, #tpu.memory_space<vmem>>, vector<32x16xf32>
    %c0_8 = arith.constant 0 : index
    %c0_9 = arith.constant 0 : index
    %9 = vector.load %arg4[%c0_8, %c0_9] : memref<1x16xf32, #tpu.memory_space<vmem>>, vector<1x16xf32>
    %cst_10 = arith.constant dense<0.000000e+00> : vector<8x16xf32>
    %10 = tpu.matmul %7, %8, %cst_10 {dimension_numbers = #tpu.dot_dimension_numbers<[1], [0], [0], [1], [0, 0, 1, 1], [], []>} : vector<8x32xf32>, vector<32x16xf32>, vector<8x16xf32> -> vector<8x16xf32>
    %11 = vector.broadcast %9 : vector<1x16xf32> to vector<8x16xf32>
    %12 = arith.addf %10, %11 : vector<8x16xf32>
    %cst_11 = arith.constant 0.000000e+00 : f32
    %13 = vector.broadcast %cst_11 : f32 to vector<8x16xf32>
    %14 = arith.maximumf %12, %13 : vector<8x16xf32>
    %c0_12 = arith.constant 0 : index
    %c0_13 = arith.constant 0 : index
    %15 = vector.load %arg5[%c0_12, %c0_13] : memref<16x32xf32, #tpu.memory_space<vmem>>, vector<16x32xf32>
    %c0_14 = arith.constant 0 : index
    %c0_15 = arith.constant 0 : index
    %16 = vector.load %arg6[%c0_14, %c0_15] : memref<1x32xf32, #tpu.memory_space<vmem>>, vector<1x32xf32>
    %cst_16 = arith.constant dense<0.000000e+00> : vector<8x32xf32>
    %17 = tpu.matmul %14, %15, %cst_16 {dimension_numbers = #tpu.dot_dimension_numbers<[1], [0], [0], [1], [0, 0, 1, 1], [], []>} : vector<8x16xf32>, vector<16x32xf32>, vector<8x32xf32> -> vector<8x32xf32>
    %18 = vector.broadcast %16 : vector<1x32xf32> to vector<8x32xf32>
    %19 = arith.addf %17, %18 : vector<8x32xf32>
    %cst_17 = arith.constant 0.000000e+00 : f32
    %20 = vector.broadcast %cst_17 : f32 to vector<8x32xf32>
    %21 = arith.maximumf %19, %20 : vector<8x32xf32>
    %c0_18 = arith.constant 0 : index
    %c0_19 = arith.constant 0 : index
    %22 = vector.load %arg7[%c0_18, %c0_19] : memref<32x128xf32, #tpu.memory_space<vmem>>, vector<32x128xf32>
    %c0_20 = arith.constant 0 : index
    %c0_21 = arith.constant 0 : index
    %23 = vector.load %arg8[%c0_20, %c0_21] : memref<1x128xf32, #tpu.memory_space<vmem>>, vector<1x128xf32>
    %cst_22 = arith.constant dense<0.000000e+00> : vector<8x128xf32>
    %24 = tpu.matmul %21, %22, %cst_22 {dimension_numbers = #tpu.dot_dimension_numbers<[1], [0], [0], [1], [0, 0, 1, 1], [], []>} : vector<8x32xf32>, vector<32x128xf32>, vector<8x128xf32> -> vector<8x128xf32>
    %25 = vector.broadcast %23 : vector<1x128xf32> to vector<8x128xf32>
    %26 = arith.addf %24, %25 : vector<8x128xf32>
    %cst_23 = arith.constant 0.000000e+00 : f32
    %27 = vector.broadcast %cst_23 : f32 to vector<8x128xf32>
    %28 = arith.subf %27, %26 : vector<8x128xf32>
    %29 = math.exp %28 : vector<8x128xf32>
    %cst_24 = arith.constant 1.000000e+00 : f32
    %30 = vector.broadcast %cst_24 : f32 to vector<8x128xf32>
    %31 = arith.addf %30, %29 : vector<8x128xf32>
    %32 = tpu.reciprocal %31 {approx = true} : vector<8x128xf32> -> vector<8x128xf32>
    %c0_25 = arith.constant 0 : index
    %c0_26 = arith.constant 0 : index
    %33 = vector.load %arg9[%c0_25, %c0_26] : memref<8x128xf32, #tpu.memory_space<vmem>>, vector<8x128xf32>
    tpu.vector_store %arg9[%c0_25, %c0_26], %32 {strides = array<i32>} : memref<8x128xf32, #tpu.memory_space<vmem>>, vector<8x128xf32>,
    return
  }
}

</mosaic_0001>

<llo_original>
// kernel: forward.1
$region0: #{forward.1}
  #allocation0 [shape = 'u32[]', space=smem, size = 0x4, offset = 0x4, fixed_abs, tag = 'smem constant byte address 0x4 - core index']
  #allocation1 [shape = 'u32[144,128]{1,0:T(1,128)}', space=vmem, size = 0x12000, scoped, tag = 'internal scratch']
  %s0 = inlined_call_operand.vmem [shape: f32[8,64], index: 0, kind: input, shape index: {}]
  %s1 = inlined_call_operand.vmem [shape: f32[64,32], index: 1, kind: input, shape index: {}]
  %s2 = inlined_call_operand.vmem [shape: f32[1,32], index: 2, kind: input, shape index: {}]
  %s3 = inlined_call_operand.vmem [shape: f32[32,16], index: 3, kind: input, shape index: {}]
  %s4 = inlined_call_operand.vmem [shape: f32[1,16], index: 4, kind: input, shape index: {}]
  %s5 = inlined_call_operand.vmem [shape: f32[16,32], index: 5, kind: input, shape index: {}]
  %s6 = inlined_call_operand.vmem [shape: f32[1,32], index: 6, kind: input, shape index: {}]
  %s7 = inlined_call_operand.vmem [shape: f32[32,128], index: 7, kind: input, shape index: {}]
  %s8 = inlined_call_operand.vmem [shape: f32[1,128], index: 8, kind: input, shape index: {}]
  %s9 = inlined_call_operand.hbm [shape: f32[8,128], index: 9, kind: output, shape index: {}]
  %s10 = sld [smem:[#allocation0]]
  $region46: #{forward.1} parent=0
    _
  %s12 = ssub.s32 1, %s10
  %s13 = scalar_select 0, %s12, %s10
  $region1: #{forward.1} parent=0
    #allocation2 [shape = 'u8[4096]{0}', space=vmem, size = 0x1000, scoped, tag = 'output window, operand 0, single buffered']
    #allocation3 [shape = 's32[1]{0}', space=sflag, size = 0x4, scoped, tag = 'scoped memory for forward.1']
    %14 = vsyncpa [#allocation3], 0
    // Predicated region
    $region2: #{forward.1} parent=1 // pred_check
      _
    $region3: #{forward.1} parent=1 // pred_check_branch
      %16 = sbr.rel (0) target = $region5
    $region4: #{forward.1} parent=1 // pred_region
      _
    $region5: #{forward.1} parent=1 // pred_fallthru
      _
    // Predicated region
    $region6: #{forward.1} parent=1 // pred_check
      _
    $region7: #{forward.1} parent=1 // pred_check_branch
      %18 = sbr.rel (0) target = $region9
    $region8: #{forward.1} parent=1 // pred_region
      _
    $region9: #{forward.1} parent=1 // pred_fallthru
      _
    // Predicated region
    $region10: #{forward.1} parent=1 // pred_check
      _
    $region11: #{forward.1} parent=1 // pred_check_branch
      %20 = sbr.rel (0) target = $region13
    $region12: #{forward.1} parent=1 // pred_region
      _
    $region13: #{forward.1} parent=1 // pred_fallthru
      _
    // Predicated region
    $region14: #{forward.1} parent=1 // pred_check
      _
    $region15: #{forward.1} parent=1 // pred_check_branch
      %22 = sbr.rel (0) target = $region17
    $region16: #{forward.1} parent=1 // pred_region
      _
    $region17: #{forward.1} parent=1 // pred_fallthru
      _
    // Predicated region
    $region18: #{forward.1} parent=1 // pred_check
      _
    $region19: #{forward.1} parent=1 // pred_check_branch
      %24 = sbr.rel (0) target = $region21
    $region20: #{forward.1} parent=1 // pred_region
      _
    $region21: #{forward.1} parent=1 // pred_fallthru
      _
    // Predicated region
    $region22: #{forward.1} parent=1 // pred_check
      _
    $region23: #{forward.1} parent=1 // pred_check_branch
      %26 = sbr.rel (0) target = $region25
    $region24: #{forward.1} parent=1 // pred_region
      _
    $region25: #{forward.1} parent=1 // pred_fallthru
      _
    // Predicated region
    $region26: #{forward.1} parent=1 // pred_check
      _
    $region27: #{forward.1} parent=1 // pred_check_branch
      %28 = sbr.rel (0) target = $region29
    $region28: #{forward.1} parent=1 // pred_region
      _
    $region29: #{forward.1} parent=1 // pred_fallthru
      _
    // Predicated region
    $region30: #{forward.1} parent=1 // pred_check
      _
    $region31: #{forward.1} parent=1 // pred_check_branch
      %30 = sbr.rel (0) target = $region33
    $region32: #{forward.1} parent=1 // pred_region
      _
    $region33: #{forward.1} parent=1 // pred_fallthru
      _
    // Predicated region
    $region34: #{forward.1} parent=1 // pred_check
      _
    $region35: #{forward.1} parent=1 // pred_check_branch
      %32 = sbr.rel (0) target = $region37
    $region36: #{forward.1} parent=1 // pred_region
      _
    $region37: #{forward.1} parent=1 // pred_fallthru
      _
    %v33 = vld [vmem:[%s0] sm:$0xff]
    %v34 = vld [vmem:[%s1] sm:$0xff]
    %v35 = vld [vmem:[%s1 + $0x8] sm:$0xff]
    %v36 = vld [vmem:[%s1 + $0x10] sm:$0xff]
    %v37 = vld [vmem:[%s1 + $0x18] sm:$0xff]
    %v38 = vld [vmem:[%s1 + $0x20] sm:$0xff]
    %v39 = vld [vmem:[%s1 + $0x28] sm:$0xff]
    %v40 = vld [vmem:[%s1 + $0x30] sm:$0xff]
    %v41 = vld [vmem:[%s1 + $0x38] sm:$0xff]
    %v42 = vld [vmem:[%s2] sm:$0x1]
    %v44 = vlaneseq
    %v45 = vshrl.u32 %v44, 7
    %v46 = vsub.s32 0, %v45
    %v47 = vrot.slane %v42, %v46
    %vm49 = vcmask 523264
    %v51 = vsel %vm49, %v33, 0
    %53 = vmatprep.subr.mxu0 0.0
    %54 = vmatpush1.msra.mxu0 0.0
    %55 = vmatprep.subr.mxu0 0.0
    %56 = vmatpush1.msra.mxu0 0.0
    %57 = vmatprep.subr.mxu0 0.0
    %58 = vmatpush1.msra.mxu0 0.0
    %59 = vmatprep.subr.mxu0 0.0
    %60 = vmatpush1.msra.mxu0 0.0
    %61 = vmatprep.subr.mxu0 0.0
    %62 = vmatpush1.msra.mxu0 0.0
    %63 = vmatprep.subr.mxu0 0.0
    %64 = vmatpush1.msra.mxu0 0.0
    %65 = vmatprep.subr.mxu0 0.0
    %66 = vmatpush1.msra.mxu0 0.0
    %67 = vmatprep.subr.mxu0 0.0
    %68 = vmatpush1.msra.mxu0 0.0
    %69 = vmatprep.subr.mxu0 0.0
    %70 = vmatpush1.msra.mxu0 %v41
    %71 = vmatprep.subr.mxu0 0.0
    %72 = vmatpush1.msra.mxu0 %v40
    %73 = vmatprep.subr.mxu0 0.0
    %74 = vmatpush1.msra.mxu0 %v39
    %75 = vmatprep.subr.mxu0 0.0
    %76 = vmatpush1.msra.mxu0 %v38
    %77 = vmatprep.subr.mxu0 0.0
    %78 = vmatpush1.msra.mxu0 %v37
    %79 = vmatprep.subr.mxu0 0.0
    %80 = vmatpush1.msra.mxu0 %v36
    %81 = vmatprep.subr.mxu0 0.0
    %82 = vmatpush1.msra.mxu0 %v35
    %83 = vmatprep.subr.mxu0 0.0
    %84 = vmatpush1.msra.mxu0 %v34
    %85 = vmatprep.subr.mxu0 0.0
    %86 = vmatpush2.msra.mxu0 0.0
    %87 = vmatprep.subr.mxu0 0.0
    %88 = vmatpush2.msra.mxu0 0.0
    %89 = vmatprep.subr.mxu0 0.0
    %90 = vmatpush2.msra.mxu0 0.0
    %91 = vmatprep.subr.mxu0 0.0
    %92 = vmatpush2.msra.mxu0 0.0
    %93 = vmatprep.subr.mxu0 0.0
    %94 = vmatpush2.msra.mxu0 0.0
    %95 = vmatprep.subr.mxu0 0.0
    %96 = vmatpush2.msra.mxu0 0.0
    %97 = vmatprep.subr.mxu0 0.0
    %98 = vmatpush2.msra.mxu0 0.0
    %99 = vmatprep.subr.mxu0 0.0
    %100 = vmatpush2.msra.mxu0 0.0
    %101 = vmatprep.subr.mxu0 0.0
    %102 = vmatpush2.msra.mxu0 0.0
    %103 = vmatprep.subr.mxu0 0.0
    %104 = vmatpush2.msra.mxu0 0.0
    %105 = vmatprep.subr.mxu0 0.0
    %106 = vmatpush2.msra.mxu0 0.0
    %107 = vmatprep.subr.mxu0 0.0
    %108 = vmatpush2.msra.mxu0 0.0
    %109 = vmatprep.subr.mxu0 0.0
    %110 = vmatpush2.msra.mxu0 0.0
    %111 = vmatprep.subr.mxu0 0.0
    %112 = vmatpush2.msra.mxu0 0.0
    %113 = vmatprep.subr.mxu0 0.0
    %114 = vmatpush2.msra.mxu0 0.0
    %115 = vmatprep.subr.mxu0 0.0
    %116 = vmatpush2.msra.mxu0 0.0
    %117 = vmatprep.mubr.f32.mxu0 0.0
    %118 = vmatmul.mubr.f32.gmra.mxu0 %v51
    %v119 = vpop.f32.mrf.mxu0
    %v120 = vadd.f32 %v47, %v119
    %v121 = vpop.f32.mrf.mxu0
    %122 = vdwg.mxu0
    %v123 = vmax.f32 %v120, 0.0
    %v124 = vld [vmem:[%s3] sm:$0xff]
    %v125 = vld [vmem:[%s3 + $0x8] sm:$0xff]
    %v126 = vld [vmem:[%s3 + $0x10] sm:$0xff]
    %v127 = vld [vmem:[%s3 + $0x18] sm:$0xff]
    %v128 = vld [vmem:[%s4] sm:$0x1]
    %v130 = vlaneseq
    %v131 = vshrl.u32 %v130, 7
    %v132 = vsub.s32 0, %v131
    %v133 = vrot.slane %v128, %v132
    %vm135 = vcmask 261120
    %v137 = vsel %vm135, %v123, 0
    %139 = vmatprep.subr.mxu0 0.0
    %140 = vmatpush1.msra.mxu0 0.0
    %141 = vmatprep.subr.mxu0 0.0
    %142 = vmatpush1.msra.mxu0 0.0
    %143 = vmatprep.subr.mxu0 0.0
    %144 = vmatpush1.msra.mxu0 0.0
    %145 = vmatprep.subr.mxu0 0.0
    %146 = vmatpush1.msra.mxu0 0.0
    %147 = vmatprep.subr.mxu0 0.0
    %148 = vmatpush1.msra.mxu0 0.0
    %149 = vmatprep.subr.mxu0 0.0
    %150 = vmatpush1.msra.mxu0 0.0
    %151 = vmatprep.subr.mxu0 0.0
    %152 = vmatpush1.msra.mxu0 0.0
    %153 = vmatprep.subr.mxu0 0.0
    %154 = vmatpush1.msra.mxu0 0.0
    %155 = vmatprep.subr.mxu0 0.0
    %156 = vmatpush1.msra.mxu0 0.0
    %157 = vmatprep.subr.mxu0 0.0
    %158 = vmatpush1.msra.mxu0 0.0
    %159 = vmatprep.subr.mxu0 0.0
    %160 = vmatpush1.msra.mxu0 0.0
    %161 = vmatprep.subr.mxu0 0.0
    %162 = vmatpush1.msra.mxu0 0.0
    %163 = vmatprep.subr.mxu0 0.0
    %164 = vmatpush1.msra.mxu0 %v127
    %165 = vmatprep.subr.mxu0 0.0
    %166 = vmatpush1.msra.mxu0 %v126
    %167 = vmatprep.subr.mxu0 0.0
    %168 = vmatpush1.msra.mxu0 %v125
    %169 = vmatprep.subr.mxu0 0.0
    %170 = vmatpush1.msra.mxu0 %v124
    %171 = vmatprep.subr.mxu0 0.0
    %172 = vmatpush2.msra.mxu0 0.0
    %173 = vmatprep.subr.mxu0 0.0
    %174 = vmatpush2.msra.mxu0 0.0
    %175 = vmatprep.subr.mxu0 0.0
    %176 = vmatpush2.msra.mxu0 0.0
    %177 = vmatprep.subr.mxu0 0.0
    %178 = vmatpush2.msra.mxu0 0.0
    %179 = vmatprep.subr.mxu0 0.0
    %180 = vmatpush2.msra.mxu0 0.0
    %181 = vmatprep.subr.mxu0 0.0
    %182 = vmatpush2.msra.mxu0 0.0
    %183 = vmatprep.subr.mxu0 0.0
    %184 = vmatpush2.msra.mxu0 0.0
    %185 = vmatprep.subr.mxu0 0.0
    %186 = vmatpush2.msra.mxu0 0.0
    %187 = vmatprep.subr.mxu0 0.0
    %188 = vmatpush2.msra.mxu0 0.0
    %189 = vmatprep.subr.mxu0 0.0
    %190 = vmatpush2.msra.mxu0 0.0
    %191 = vmatprep.subr.mxu0 0.0
    %192 = vmatpush2.msra.mxu0 0.0
    %193 = vmatprep.subr.mxu0 0.0
    %194 = vmatpush2.msra.mxu0 0.0
    %195 = vmatprep.subr.mxu0 0.0
    %196 = vmatpush2.msra.mxu0 0.0
    %197 = vmatprep.subr.mxu0 0.0
    %198 = vmatpush2.msra.mxu0 0.0
    %199 = vmatprep.subr.mxu0 0.0
    %200 = vmatpush2.msra.mxu0 0.0
    %201 = vmatprep.subr.mxu0 0.0
    %202 = vmatpush2.msra.mxu0 0.0
    %203 = vmatprep.mubr.f32.mxu0 0.0
    %204 = vmatmul.mubr.f32.gmra.mxu0 %v137
    %v205 = vpop.f32.mrf.mxu0
    %v206 = vadd.f32 %v133, %v205
    %v207 = vpop.f32.mrf.mxu0
    %208 = vdwg.mxu0
    %v209 = vmax.f32 %v206, 0.0
    %v210 = vld [vmem:[%s5] sm:$0xff]
    %v211 = vld [vmem:[%s5 + $0x8] sm:$0xff]
    %v212 = vld [vmem:[%s6] sm:$0x1]
    %v214 = vlaneseq
    %v215 = vshrl.u32 %v214, 7
    %v216 = vsub.s32 0, %v215
    %v217 = vrot.slane %v212, %v216
    %vm219 = vcmask 130048
    %v221 = vsel %vm219, %v209, 0
    %223 = vmatprep.subr.mxu0 0.0
    %224 = vmatpush1.msra.mxu0 0.0
    %225 = vmatprep.subr.mxu0 0.0
    %226 = vmatpush1.msra.mxu0 0.0
    %227 = vmatprep.subr.mxu0 0.0
    %228 = vmatpush1.msra.mxu0 0.0
    %229 = vmatprep.subr.mxu0 0.0
    %230 = vmatpush1.msra.mxu0 0.0
    %231 = vmatprep.subr.mxu0 0.0
    %232 = vmatpush1.msra.mxu0 0.0
    %233 = vmatprep.subr.mxu0 0.0
    %234 = vmatpush1.msra.mxu0 0.0
    %235 = vmatprep.subr.mxu0 0.0
    %236 = vmatpush1.msra.mxu0 0.0
    %237 = vmatprep.subr.mxu0 0.0
    %238 = vmatpush1.msra.mxu0 0.0
    %239 = vmatprep.subr.mxu0 0.0
    %240 = vmatpush1.msra.mxu0 0.0
    %241 = vmatprep.subr.mxu0 0.0
    %242 = vmatpush1.msra.mxu0 0.0
    %243 = vmatprep.subr.mxu0 0.0
    %244 = vmatpush1.msra.mxu0 0.0
    %245 = vmatprep.subr.mxu0 0.0
    %246 = vmatpush1.msra.mxu0 0.0
    %247 = vmatprep.subr.mxu0 0.0
    %248 = vmatpush1.msra.mxu0 0.0
    %249 = vmatprep.subr.mxu0 0.0
    %250 = vmatpush1.msra.mxu0 0.0
    %251 = vmatprep.subr.mxu0 0.0
    %252 = vmatpush1.msra.mxu0 %v211
    %253 = vmatprep.subr.mxu0 0.0
    %254 = vmatpush1.msra.mxu0 %v210
    %255 = vmatprep.subr.mxu0 0.0
    %256 = vmatpush2.msra.mxu0 0.0
    %257 = vmatprep.subr.mxu0 0.0
    %258 = vmatpush2.msra.mxu0 0.0
    %259 = vmatprep.subr.mxu0 0.0
    %260 = vmatpush2.msra.mxu0 0.0
    %261 = vmatprep.subr.mxu0 0.0
    %262 = vmatpush2.msra.mxu0 0.0
    %263 = vmatprep.subr.mxu0 0.0
    %264 = vmatpush2.msra.mxu0 0.0
    %265 = vmatprep.subr.mxu0 0.0
    %266 = vmatpush2.msra.mxu0 0.0
    %267 = vmatprep.subr.mxu0 0.0
    %268 = vmatpush2.msra.mxu0 0.0
    %269 = vmatprep.subr.mxu0 0.0
    %270 = vmatpush2.msra.mxu0 0.0
    %271 = vmatprep.subr.mxu0 0.0
    %272 = vmatpush2.msra.mxu0 0.0
    %273 = vmatprep.subr.mxu0 0.0
    %274 = vmatpush2.msra.mxu0 0.0
    %275 = vmatprep.subr.mxu0 0.0
    %276 = vmatpush2.msra.mxu0 0.0
    %277 = vmatprep.subr.mxu0 0.0
    %278 = vmatpush2.msra.mxu0 0.0
    %279 = vmatprep.subr.mxu0 0.0
    %280 = vmatpush2.msra.mxu0 0.0
    %281 = vmatprep.subr.mxu0 0.0
    %282 = vmatpush2.msra.mxu0 0.0
    %283 = vmatprep.subr.mxu0 0.0
    %284 = vmatpush2.msra.mxu0 0.0
    %285 = vmatprep.subr.mxu0 0.0
    %286 = vmatpush2.msra.mxu0 0.0
    %287 = vmatprep.mubr.f32.mxu0 0.0
    %288 = vmatmul.mubr.f32.gmra.mxu0 %v221
    %v289 = vpop.f32.mrf.mxu0
    %v290 = vadd.f32 %v217, %v289
    %v291 = vpop.f32.mrf.mxu0
    %292 = vdwg.mxu0
    %v293 = vmax.f32 %v290, 0.0
    %v294 = vld [vmem:[%s7] sm:$0xff]
    %v295 = vld [vmem:[%s7 + $0x8] sm:$0xff]
    %v296 = vld [vmem:[%s7 + $0x10] sm:$0xff]
    %v297 = vld [vmem:[%s7 + $0x18] sm:$0xff]
    %v298 = vld [vmem:[%s8] sm:$0x1]
    %v300 = vlaneseq
    %v301 = vshrl.u32 %v300, 7
    %v302 = vsub.s32 0, %v301
    %v303 = vrot.slane %v298, %v302
    %v306 = vsel %vm135, %v293, 0
    %308 = vmatprep.subr.mxu0 0.0
    %309 = vmatpush1.msra.mxu0 0.0
    %310 = vmatprep.subr.mxu0 0.0
    %311 = vmatpush1.msra.mxu0 0.0
    %312 = vmatprep.subr.mxu0 0.0
    %313 = vmatpush1.msra.mxu0 0.0
    %314 = vmatprep.subr.mxu0 0.0
    %315 = vmatpush1.msra.mxu0 0.0
    %316 = vmatprep.subr.mxu0 0.0
    %317 = vmatpush1.msra.mxu0 0.0
    %318 = vmatprep.subr.mxu0 0.0
    %319 = vmatpush1.msra.mxu0 0.0
    %320 = vmatprep.subr.mxu0 0.0
    %321 = vmatpush1.msra.mxu0 0.0
    %322 = vmatprep.subr.mxu0 0.0
    %323 = vmatpush1.msra.mxu0 0.0
    %324 = vmatprep.subr.mxu0 0.0
    %325 = vmatpush1.msra.mxu0 0.0
    %326 = vmatprep.subr.mxu0 0.0
    %327 = vmatpush1.msra.mxu0 0.0
    %328 = vmatprep.subr.mxu0 0.0
    %329 = vmatpush1.msra.mxu0 0.0
    %330 = vmatprep.subr.mxu0 0.0
    %331 = vmatpush1.msra.mxu0 0.0
    %332 = vmatprep.subr.mxu0 0.0
    %333 = vmatpush1.msra.mxu0 %v297
    %334 = vmatprep.subr.mxu0 0.0
    %335 = vmatpush1.msra.mxu0 %v296
    %336 = vmatprep.subr.mxu0 0.0
    %337 = vmatpush1.msra.mxu0 %v295
    %338 = vmatprep.subr.mxu0 0.0
    %339 = vmatpush1.msra.mxu0 %v294
    %340 = vmatprep.subr.mxu0 0.0
    %341 = vmatpush2.msra.mxu0 0.0
    %342 = vmatprep.subr.mxu0 0.0
    %343 = vmatpush2.msra.mxu0 0.0
    %344 = vmatprep.subr.mxu0 0.0
    %345 = vmatpush2.msra.mxu0 0.0
    %346 = vmatprep.subr.mxu0 0.0
    %347 = vmatpush2.msra.mxu0 0.0
    %348 = vmatprep.subr.mxu0 0.0
    %349 = vmatpush2.msra.mxu0 0.0
    %350 = vmatprep.subr.mxu0 0.0
    %351 = vmatpush2.msra.mxu0 0.0
    %352 = vmatprep.subr.mxu0 0.0
    %353 = vmatpush2.msra.mxu0 0.0
    %354 = vmatprep.subr.mxu0 0.0
    %355 = vmatpush2.msra.mxu0 0.0
    %356 = vmatprep.subr.mxu0 0.0
    %357 = vmatpush2.msra.mxu0 0.0
    %358 = vmatprep.subr.mxu0 0.0
    %359 = vmatpush2.msra.mxu0 0.0
    %360 = vmatprep.subr.mxu0 0.0
    %361 = vmatpush2.msra.mxu0 0.0
    %362 = vmatprep.subr.mxu0 0.0
    %363 = vmatpush2.msra.mxu0 0.0
    %364 = vmatprep.subr.mxu0 0.0
    %365 = vmatpush2.msra.mxu0 0.0
    %366 = vmatprep.subr.mxu0 0.0
    %367 = vmatpush2.msra.mxu0 0.0
    %368 = vmatprep.subr.mxu0 0.0
    %369 = vmatpush2.msra.mxu0 0.0
    %370 = vmatprep.subr.mxu0 0.0
    %371 = vmatpush2.msra.mxu0 0.0
    %372 = vmatprep.mubr.f32.mxu0 0.0
    %373 = vmatmul.mubr.f32.gmra.mxu0 %v306
    %v374 = vpop.f32.mrf.mxu0
    %v375 = vadd.f32 %v303, %v374
    %v376 = vpop.f32.mrf.mxu0
    %377 = vdwg.mxu0
    %v378 = vsub.f32 0.0, %v375
    %v379 = vmul.f32 %v378, 1.442695
    %v380 = vpow.pop %v379
    %v381 = vadd.f32 %v380, 1.0
    %v382 = vrcp.pop %v381
    %383 = vst [vmem:[#allocation2] sm:$0xff] %v382
    // Predicated region
    $region38: #{forward.1} parent=1 // pred_check
      _
    $region39: #{forward.1} parent=1 // pred_check_branch
      %385 = sbr.rel (0) target = $region41
    $region40: #{forward.1} parent=1 // pred_region
      %s387 = ssub.s32 128, 128
      %388 = vsyncadd [#allocation3], %s387
      %s390 = sshll.u32 [#allocation2], 4
      %s391 = int_to_ptr.vmem [resolvable:$true] %s390
      %393 = dma.vmem_to_hbm [thread:$0]  %s391, 128, %s9, [#allocation3]
    $region41: #{forward.1} parent=1 // pred_fallthru
      _
    // Predicated region
    $region42: #{forward.1} parent=1 // pred_check
      _
    $region43: #{forward.1} parent=1 // pred_check_branch
      %395 = sbr.rel (0) target = $region45
    $region44: #{forward.1} parent=1 // pred_region
      %396 = dma.done [#allocation3], 128
    $region45: #{forward.1} parent=1 // pred_fallthru
      _
    %397 = vsyncpa [#allocation3], 1

</llo_original>
